<compile_context>
chip_gen: v7x
topology: tpu7x:2x2x1
jax: 0.10.0
libtpu: 0.0.40
codegen_flags: <defaults>
</compile_context>

<pallas_src>
import jax
import jax.numpy as jnp
from jax.experimental import pallas as pl
from jax.experimental.pallas import tpu as pltpu

BN_EPS = 1e-5


def ranknet_kernel(x_ref, w1_ref, vp_ref, b2_ref, o_ref):
    """Whole forward pass for both documents in one VMEM-resident block.

    x_ref  : [2, B, Fin]  stacked (x1, x2)
    w1_ref : [Fin, H]     fc1 weight (pre-transposed for x @ W)
    vp_ref : [8, H]       packed vectors: row0=gamma, row1=beta, row2=w2^T
    b2_ref : (1,) SMEM    fc2 bias scalar
    o_ref  : [1, B]       lane-dense sigmoid(score1 - score2)
    """
    _, B, Fin = x_ref.shape
    H = w1_ref.shape[1]

    # --- fc1 for both documents with ONE MXU matmul: [2B, Fin] @ [Fin, H] ---
    # (fc1 bias is omitted: it cancels exactly under batch-statistics BN.)
    x2d = x_ref[...].reshape(2 * B, Fin)                      # free leading-axis reshape
    h = jnp.dot(x2d, w1_ref[...],
                preferred_element_type=jnp.float32)           # [2B, H]
    hh = h.reshape(2, B, H)                                   # per-document view

    gamma = vp_ref[0:1, :].reshape(1, 1, H)
    beta = vp_ref[1:2, :].reshape(1, 1, H)
    w2row = vp_ref[2:3, :].reshape(1, 1, H)
    b2 = b2_ref[0]                                            # scalar from SMEM

    # --- BatchNorm1d (training mode: per-batch mean, biased variance) folded
    #     into a single affine, vectorized over both documents at once. ---
    mean = jnp.mean(hh, axis=1, keepdims=True)                # [2, 1, H]
    diff = hh - mean
    var = jnp.mean(diff * diff, axis=1, keepdims=True)        # [2, 1, H]
    scale = gamma * jax.lax.rsqrt(var + BN_EPS)
    shift = beta - mean * scale
    a = jnp.maximum(hh * scale + shift, 0.0)                  # BN + ReLU, [2, B, H]

    # --- fc2 (out_features == 1): VPU multiply + XLU lane reduce, then ReLU6 ---
    s = jnp.clip(jnp.sum(a * w2row, axis=-1) + b2, 0.0, 6.0)  # [2, B]

    # --- pairwise score difference + sigmoid, lane-dense store ---
    o_ref[...] = jax.nn.sigmoid(s[0:1, :] - s[1:2, :])        # [1, B]


def ranknet_forward(x1, x2, params):
    w1, b1, gamma, beta, w2, b2 = params
    del b1  # cancels under training-mode (batch-statistics) BatchNorm
    batch, _ = x1.shape
    hidden = w1.shape[1]
    out_features = w2.shape[1]
    # TODO(synk): kernel is specialized to out_features == 1 (RankNet score);
    # out_features > 1 would use an MXU dot for fc2 instead of the lane-reduce.
    assert out_features == 1, "kernel specialized to out_features == 1"
    assert batch % 8 == 0, "keep batch a multiple of 8 sublanes for free reshapes"

    # Pre-stack the two documents into one contiguous DMA slab.
    x = jnp.stack([x1, x2], axis=0).astype(jnp.float32)       # [2, B, Fin]

    # Pack the small per-feature vectors into a single (8, H) VMEM tile.
    packed = jnp.concatenate(
        [gamma.reshape(1, hidden),
         beta.reshape(1, hidden),
         w2.reshape(1, hidden),                               # w2^T (H -> 1)
         jnp.zeros((5, hidden), dtype=jnp.float32)], axis=0)  # pad to 8 sublanes

    b2s = b2.reshape((1,)).astype(jnp.float32)                # scalar via SMEM

    vmem = pl.BlockSpec(memory_space=pltpu.MemorySpace.VMEM)
    smem = pl.BlockSpec(memory_space=pltpu.MemorySpace.SMEM)

    out = pl.pallas_call(
        ranknet_kernel,
        out_shape=jax.ShapeDtypeStruct((1, batch), jnp.float32),
        in_specs=[vmem, vmem, vmem, smem],
        out_specs=vmem,
    )(x, w1, packed, b2s)
    return out.reshape(batch, out_features)


def init_params(key, in_features, hidden_size, out_features):
    """Deterministic init matching RankNetMLP.init_parameters():
       xavier_normal_ for Linear weights, zeros for Linear biases,
       BatchNorm left at its default (gamma=1, beta=0)."""
    k1, k2 = jax.random.split(key)

    def xavier_normal(k, fan_in, fan_out):
        std = (2.0 / (fan_in + fan_out)) ** 0.5
        # stored already transposed as [fan_in, fan_out] for x @ W
        return std * jax.random.normal(k, (fan_in, fan_out), dtype=jnp.float32)

    w1 = xavier_normal(k1, in_features, hidden_size)
    b1 = jnp.zeros((1, hidden_size), dtype=jnp.float32)
    gamma = jnp.ones((1, hidden_size), dtype=jnp.float32)
    beta = jnp.zeros((1, hidden_size), dtype=jnp.float32)
    w2 = xavier_normal(k2, hidden_size, out_features)
    b2 = jnp.zeros((1, out_features), dtype=jnp.float32)
    return (w1, b1, gamma, beta, w2, b2)


def ranknet_reference(x1, x2, params):
    """Pure-JAX reference for correctness checking (mirrors the torch module)."""
    w1, b1, gamma, beta, w2, b2 = params

    def mlp(x):
        h = x @ w1 + b1
        mean = jnp.mean(h, axis=0, keepdims=True)
        var = jnp.mean((h - mean) ** 2, axis=0, keepdims=True)
        h = (h - mean) / jnp.sqrt(var + BN_EPS) * gamma + beta
        h = jnp.maximum(h, 0.0)
        o = h @ w2 + b2
        return jnp.clip(o, 0.0, 6.0)

    return jax.nn.sigmoid(mlp(x1) - mlp(x2))


if __name__ == "__main__":
    batch, in_features, hidden_size, out_features = 8, 16, 32, 1

    key = jax.random.PRNGKey(0)
    kx1, kx2, kp = jax.random.split(key, 3)

    x1 = jax.random.normal(kx1, (batch, in_features), dtype=jnp.float32)
    x2 = jax.random.normal(kx2, (batch, in_features), dtype=jnp.float32)
    params = init_params(kp, in_features, hidden_size, out_features)

    out = ranknet_forward(x1, x2, params)
    out = jax.block_until_ready(out)

    ref = ranknet_reference(x1, x2, params)
    assert out.shape == (batch, out_features)
    assert jnp.allclose(out, ref, atol=1e-5, rtol=1e-5), "mismatch vs reference"

    print("KERNEL_OK")
</pallas_src>

<mosaic_0001>
module attributes {stable_mosaic.version = 11 : i64} {
  func.func @ranknet_kernel(%arg0: memref<2x8x16xf32, #tpu.memory_space<vmem>>, %arg1: memref<16x32xf32, #tpu.memory_space<vmem>>, %arg2: memref<8x32xf32, #tpu.memory_space<vmem>>, %arg3: memref<1xf32, #tpu.memory_space<smem>>, %arg4: memref<1x8xf32, #tpu.memory_space<vmem>>) attributes {dimension_semantics = [], scalar_prefetch = 0 : i64, scratch_operands = 0 : i64, tpu.core_type = #tpu.core_type<tc>} {
    %c0 = arith.constant 0 : index
    %c0_0 = arith.constant 0 : index
    %c0_1 = arith.constant 0 : index
    %0 = vector.load %arg0[%c0, %c0_0, %c0_1] : memref<2x8x16xf32, #tpu.memory_space<vmem>>, vector<2x8x16xf32>
    %1 = vector.shape_cast %0 : vector<2x8x16xf32> to vector<16x16xf32>
    %c0_2 = arith.constant 0 : index
    %c0_3 = arith.constant 0 : index
    %2 = vector.load %arg1[%c0_2, %c0_3] : memref<16x32xf32, #tpu.memory_space<vmem>>, vector<16x32xf32>
    %cst = arith.constant dense<0.000000e+00> : vector<16x32xf32>
    %3 = tpu.matmul %1, %2, %cst {dimension_numbers = #tpu.dot_dimension_numbers<[1], [0], [0], [1], [0, 0, 1, 1], [], []>} : vector<16x16xf32>, vector<16x32xf32>, vector<16x32xf32> -> vector<16x32xf32>
    %4 = vector.shape_cast %3 : vector<16x32xf32> to vector<2x8x32xf32>
    %c0_4 = arith.constant 0 : index
    %c0_5 = arith.constant 0 : index
    %5 = vector.load %arg2[%c0_4, %c0_5] : memref<8x32xf32, #tpu.memory_space<vmem>>, vector<1x32xf32>
    %6 = vector.shape_cast %5 : vector<1x32xf32> to vector<1x1x32xf32>
    %c1 = arith.constant 1 : index
    %c0_6 = arith.constant 0 : index
    %7 = vector.load %arg2[%c1, %c0_6] : memref<8x32xf32, #tpu.memory_space<vmem>>, vector<1x32xf32>
    %8 = vector.shape_cast %7 : vector<1x32xf32> to vector<1x1x32xf32>
    %c2 = arith.constant 2 : index
    %c0_7 = arith.constant 0 : index
    %9 = vector.load %arg2[%c2, %c0_7] : memref<8x32xf32, #tpu.memory_space<vmem>>, vector<1x32xf32>
    %10 = vector.shape_cast %9 : vector<1x32xf32> to vector<1x1x32xf32>
    %c0_8 = arith.constant 0 : index
    %11 = memref.load %arg3[%c0_8] : memref<1xf32, #tpu.memory_space<smem>>
    %cst_9 = arith.constant dense<0.000000e+00> : vector<2x32xf32>
    %12 = vector.multi_reduction <add>, %4, %cst_9 [1] : vector<2x8x32xf32> to vector<2x32xf32>
    %13 = vector.shape_cast %12 : vector<2x32xf32> to vector<2x1x32xf32>
    %cst_10 = arith.constant 8.000000e+00 : f32
    %14 = vector.broadcast %cst_10 : f32 to vector<2x1x32xf32>
    %15 = arith.divf %13, %14 : vector<2x1x32xf32>
    %16 = vector.broadcast %15 : vector<2x1x32xf32> to vector<2x8x32xf32>
    %17 = arith.subf %4, %16 : vector<2x8x32xf32>
    %18 = arith.mulf %17, %17 : vector<2x8x32xf32>
    %cst_11 = arith.constant dense<0.000000e+00> : vector<2x32xf32>
    %19 = vector.multi_reduction <add>, %18, %cst_11 [1] : vector<2x8x32xf32> to vector<2x32xf32>
    %20 = vector.shape_cast %19 : vector<2x32xf32> to vector<2x1x32xf32>
    %cst_12 = arith.constant 8.000000e+00 : f32
    %21 = vector.broadcast %cst_12 : f32 to vector<2x1x32xf32>
    %22 = arith.divf %20, %21 : vector<2x1x32xf32>
    %cst_13 = arith.constant 9.99999974E-6 : f32
    %23 = vector.broadcast %cst_13 : f32 to vector<2x1x32xf32>
    %24 = arith.addf %22, %23 : vector<2x1x32xf32>
    %25 = math.rsqrt %24 : vector<2x1x32xf32>
    %26 = vector.broadcast %6 : vector<1x1x32xf32> to vector<2x1x32xf32>
    %27 = arith.mulf %26, %25 : vector<2x1x32xf32>
    %28 = arith.mulf %15, %27 : vector<2x1x32xf32>
    %29 = vector.broadcast %8 : vector<1x1x32xf32> to vector<2x1x32xf32>
    %30 = arith.subf %29, %28 : vector<2x1x32xf32>
    %31 = vector.broadcast %27 : vector<2x1x32xf32> to vector<2x8x32xf32>
    %32 = arith.mulf %4, %31 : vector<2x8x32xf32>
    %33 = vector.broadcast %30 : vector<2x1x32xf32> to vector<2x8x32xf32>
    %34 = arith.addf %32, %33 : vector<2x8x32xf32>
    %cst_14 = arith.constant 0.000000e+00 : f32
    %35 = vector.broadcast %cst_14 : f32 to vector<2x8x32xf32>
    %36 = arith.maximumf %34, %35 : vector<2x8x32xf32>
    %37 = vector.broadcast %10 : vector<1x1x32xf32> to vector<2x8x32xf32>
    %38 = arith.mulf %36, %37 : vector<2x8x32xf32>
    %cst_15 = arith.constant dense<0.000000e+00> : vector<2x8xf32>
    %39 = vector.multi_reduction <add>, %38, %cst_15 [2] : vector<2x8x32xf32> to vector<2x8xf32>
    %40 = vector.broadcast %11 : f32 to vector<2x8xf32>
    %41 = arith.addf %39, %40 : vector<2x8xf32>
    %cst_16 = arith.constant 0.000000e+00 : f32
    %cst_17 = arith.constant 6.000000e+00 : f32
    %42 = vector.broadcast %cst_16 : f32 to vector<2x8xf32>
    %43 = arith.maximumf %42, %41 : vector<2x8xf32>
    %44 = vector.broadcast %cst_17 : f32 to vector<2x8xf32>
    %45 = arith.minimumf %44, %43 : vector<2x8xf32>
    %46 = vector.extract_strided_slice %45 {offsets = [0, 0], sizes = [1, 8], strides = [1, 1]} : vector<2x8xf32> to vector<1x8xf32>
    %47 = vector.extract_strided_slice %45 {offsets = [1, 0], sizes = [1, 8], strides = [1, 1]} : vector<2x8xf32> to vector<1x8xf32>
    %48 = arith.subf %46, %47 : vector<1x8xf32>
    %49 = arith.negf %48 : vector<1x8xf32>
    %50 = math.exp %49 : vector<1x8xf32>
    %cst_18 = arith.constant 1.000000e+00 : f32
    %51 = vector.broadcast %cst_18 : f32 to vector<1x8xf32>
    %52 = arith.addf %51, %50 : vector<1x8xf32>
    %53 = arith.divf %51, %52 : vector<1x8xf32>
    %c0_19 = arith.constant 0 : index
    %c0_20 = arith.constant 0 : index
    %54 = vector.load %arg4[%c0_19, %c0_20] : memref<1x8xf32, #tpu.memory_space<vmem>>, vector<1x8xf32>
    tpu.vector_store %arg4[%c0_19, %c0_20], %53 {strides = array<i32>} : memref<1x8xf32, #tpu.memory_space<vmem>>, vector<1x8xf32>,
    return
  }
}

</mosaic_0001>

<llo_original>
// kernel: tpu_custom_call.1
$region0: #{tpu_custom_call.1}
  #allocation0 [shape = 'u32[]', space=smem, size = 0x4, offset = 0x4, fixed_abs, tag = 'smem constant byte address 0x4 - core index']
  #allocation1 [shape = 'u32[144,128]{1,0:T(1,128)}', space=vmem, size = 0x12000, scoped, tag = 'internal scratch']
  #allocation2 [shape = 'f32[1]{0:T(128)S(6)}', space=smem, size = 0x200, scoped, tag = 'scoped memory for tpu_custom_call.1']
  %s0 = inlined_call_operand.hbm [shape: f32[2,8,16], index: 0, kind: input, shape index: {}]
  %s1 = inlined_call_operand.hbm [shape: f32[16,32], index: 1, kind: input, shape index: {}]
  %s2 = inlined_call_operand.vmem [shape: f32[8,32], index: 2, kind: input, shape index: {}]
  %s3 = inlined_call_operand.<no memory space> [shape: f32[1], index: 3, kind: input, shape index: {}]
  %s4 = inlined_call_operand.hbm [shape: f32[1,8], index: 4, kind: output, shape index: {}]
  %s5 = sld [smem:[#allocation0]]
  $region34: #{tpu_custom_call.1} parent=0
    _
  %s7 = ssub.s32 1, %s5
  %s8 = scalar_select 0, %s7, %s5
  %9 = sst [smem:[#allocation2]] %s3
  $region1: #{tpu_custom_call.1} parent=0
    #allocation3 [shape = 'u8[8192]{0}', space=vmem, size = 0x2000, scoped, tag = 'input window, operand 0, single buffered']
    #allocation4 [shape = 's32[1]{0}', space=sflag, size = 0x4, scoped, tag = 'scoped memory for tpu_custom_call.1']
    #allocation5 [shape = 's32[1]{0}', space=sflag, size = 0x4, scoped, tag = 'scoped memory for tpu_custom_call.1']
    #allocation6 [shape = 'u8[8192]{0}', space=vmem, size = 0x2000, scoped, tag = 'input window, operand 1, single buffered']
    #allocation7 [shape = 's32[1]{0}', space=sflag, size = 0x4, scoped, tag = 'scoped memory for tpu_custom_call.1']
    #allocation8 [shape = 'u8[512]{0}', space=vmem, size = 0x400, scoped, tag = 'output window, operand 0, single buffered']
    %10 = vsyncpa [#allocation4], 0
    %11 = vsyncpa [#allocation7], 0
    %12 = vsyncpa [#allocation5], 0
    // Predicated region
    $region2: #{tpu_custom_call.1} parent=1 // pred_check
      _
    $region3: #{tpu_custom_call.1} parent=1 // pred_check_branch
      %14 = sbr.rel (0) target = $region5
    $region4: #{tpu_custom_call.1} parent=1 // pred_region
      %s16 = ssub.s32 256, 256
      %17 = vsyncadd [#allocation4], %s16
      %s18 = sshll.u32 [#allocation3], 4
      %s19 = int_to_ptr.vmem [resolvable:$true] %s18
      %24 = dma.hbm_to_vmem [thread:$0]  %s0, 256, %s19, [#allocation4], 128, 128, 8
    $region5: #{tpu_custom_call.1} parent=1 // pred_fallthru
      _
    // Predicated region
    $region6: #{tpu_custom_call.1} parent=1 // pred_check
      _
    $region7: #{tpu_custom_call.1} parent=1 // pred_check_branch
      %26 = sbr.rel (0) target = $region9
    $region8: #{tpu_custom_call.1} parent=1 // pred_region
      %s28 = ssub.s32 256, 256
      %29 = vsyncadd [#allocation7], %s28
      %s30 = sshll.u32 [#allocation6], 4
      %s31 = int_to_ptr.vmem [resolvable:$true] %s30
      %36 = dma.hbm_to_vmem [thread:$0]  %s1, 256, %s31, [#allocation7], 128, 128, 8
    $region9: #{tpu_custom_call.1} parent=1 // pred_fallthru
      _
    // Predicated region
    $region10: #{tpu_custom_call.1} parent=1 // pred_check
      _
    $region11: #{tpu_custom_call.1} parent=1 // pred_check_branch
      %38 = sbr.rel (0) target = $region13
    $region12: #{tpu_custom_call.1} parent=1 // pred_region
      _
    $region13: #{tpu_custom_call.1} parent=1 // pred_fallthru
      _
    // Predicated region
    $region14: #{tpu_custom_call.1} parent=1 // pred_check
      _
    $region15: #{tpu_custom_call.1} parent=1 // pred_check_branch
      %40 = sbr.rel (0) target = $region17
    $region16: #{tpu_custom_call.1} parent=1 // pred_region
      _
    $region17: #{tpu_custom_call.1} parent=1 // pred_fallthru
      _
    // Predicated region
    $region18: #{tpu_custom_call.1} parent=1 // pred_check
      _
    $region19: #{tpu_custom_call.1} parent=1 // pred_check_branch
      %42 = sbr.rel (0) target = $region21
    $region20: #{tpu_custom_call.1} parent=1 // pred_region
      %43 = dma.done [#allocation4], 256
    $region21: #{tpu_custom_call.1} parent=1 // pred_fallthru
      _
    // Predicated region
    $region22: #{tpu_custom_call.1} parent=1 // pred_check
      _
    $region23: #{tpu_custom_call.1} parent=1 // pred_check_branch
      %45 = sbr.rel (0) target = $region25
    $region24: #{tpu_custom_call.1} parent=1 // pred_region
      %46 = dma.done [#allocation7], 256
    $region25: #{tpu_custom_call.1} parent=1 // pred_fallthru
      _
    %v47 = vld [vmem:[#allocation3] sm:$0xff]
    %v48 = vld [vmem:[#allocation3 + $0x8] sm:$0xff]
    %v49 = vld [vmem:[#allocation6] sm:$0xff]
    %v50 = vld [vmem:[#allocation6 + $0x8] sm:$0xff]
    %vm51 = vcmask 130048
    %v53 = vsel %vm51, %v47, 0
    %v56 = vsel %vm51, %v48, 0
    %58 = vmatprep.subr.mxu0 0.0
    %59 = vmatpush1.msra.mxu0 %v49
    %60 = vmatprep.subr.mxu0 0.0
    %61 = vmatpush1.msra.mxu0 %v50
    %62 = vmatprep.subr.mxu0 0.0
    %63 = vmatpush1.msra.mxu0 0.0
    %64 = vmatprep.subr.mxu0 0.0
    %65 = vmatpush1.msra.mxu0 0.0
    %66 = vmatprep.subr.mxu0 0.0
    %67 = vmatpush1.msra.mxu0 0.0
    %68 = vmatprep.subr.mxu0 0.0
    %69 = vmatpush1.msra.mxu0 0.0
    %70 = vmatprep.subr.mxu0 0.0
    %71 = vmatpush1.msra.mxu0 0.0
    %72 = vmatprep.subr.mxu0 0.0
    %73 = vmatpush1.msra.mxu0 0.0
    %74 = vmatprep.subr.mxu0 0.0
    %75 = vmatpush1.msra.mxu0 0.0
    %76 = vmatprep.subr.mxu0 0.0
    %77 = vmatpush1.msra.mxu0 0.0
    %78 = vmatprep.subr.mxu0 0.0
    %79 = vmatpush1.msra.mxu0 0.0
    %80 = vmatprep.subr.mxu0 0.0
    %81 = vmatpush1.msra.mxu0 0.0
    %82 = vmatprep.subr.mxu0 0.0
    %83 = vmatpush1.msra.mxu0 0.0
    %84 = vmatprep.subr.mxu0 0.0
    %85 = vmatpush1.msra.mxu0 0.0
    %86 = vmatprep.subr.mxu0 0.0
    %87 = vmatpush1.msra.mxu0 0.0
    %88 = vmatprep.subr.mxu0 0.0
    %89 = vmatpush1.msra.mxu0 0.0
    %90 = vmatprep.subr.mxu0 0.0
    %91 = vmatpush1.msra.mxu0 0.0
    %92 = vmatprep.subr.mxu0 0.0
    %93 = vmatpush1.msra.mxu0 0.0
    %94 = vmatprep.subr.mxu0 0.0
    %95 = vmatpush1.msra.mxu0 0.0
    %96 = vmatprep.subr.mxu0 0.0
    %97 = vmatpush1.msra.mxu0 0.0
    %98 = vmatprep.subr.mxu0 0.0
    %99 = vmatpush1.msra.mxu0 0.0
    %100 = vmatprep.subr.mxu0 0.0
    %101 = vmatpush1.msra.mxu0 0.0
    %102 = vmatprep.subr.mxu0 0.0
    %103 = vmatpush1.msra.mxu0 0.0
    %104 = vmatprep.subr.mxu0 0.0
    %105 = vmatpush1.msra.mxu0 0.0
    %106 = vmatprep.subr.mxu0 0.0
    %107 = vmatpush1.msra.mxu0 0.0
    %108 = vmatprep.subr.mxu0 0.0
    %109 = vmatpush1.msra.mxu0 0.0
    %110 = vmatprep.subr.mxu0 0.0
    %111 = vmatpush1.msra.mxu0 0.0
    %112 = vmatprep.subr.mxu0 0.0
    %113 = vmatpush1.msra.mxu0 0.0
    %114 = vmatprep.subr.mxu0 0.0
    %115 = vmatpush1.msra.mxu0 0.0
    %116 = vmatprep.subr.mxu0 0.0
    %117 = vmatpush1.msra.mxu0 0.0
    %118 = vmatprep.subr.mxu0 0.0
    %119 = vmatpush1.msra.mxu0 0.0
    %120 = vmatprep.subr.mxu0 0.0
    %121 = vmatpush1.msra.mxu0 0.0
    %122 = vmatprep.mubr.f32.mxu0 0.0
    %123 = vmatmul.mubr.f32.gmra.mrb[0].mxu0 %v53
    %v124 = vpop.f32.mrb[0].mxu0
    %v125 = vadd.f32 0.0, %v124
    %v126 = vpop.f32.mrb[0].mxu0
    %127 = vmatprep.mubr.f32.mxu0 0.0
    %128 = vmatmul.mubr.f32.gmra.mrb[0].mxu0 %v56
    %v129 = vpop.f32.mrb[0].mxu0
    %v130 = vadd.f32 0.0, %v129
    %v131 = vpop.f32.mrb[0].mxu0
    %132 = vdwg.mxu0
    %v133 = vld [vmem:[%s2] sm:$0x1]
    %v134 = vld [vmem:[%s2 + $0x1] sm:$0x1]
    %v135 = vld [vmem:[%s2 + $0x2] sm:$0x1]
    %s136 = sld [smem:[#allocation2]]
    %vm137 = vcmask 261120
    %v138 = vsel %vm137, %v125, 0.0
    %v139 = vrot.slane %v138, 4
    %v140 = vadd.f32 %v138, %v139
    %v141 = vrot.slane %v140, 2
    %v142 = vadd.f32 %v140, %v141
    %v143 = vrot.slane %v142, 1
    %v144 = vadd.f32 %v142, %v143
    %v145 = vsel %vm137, %v130, 0.0
    %v146 = vrot.slane %v145, 4
    %v147 = vadd.f32 %v145, %v146
    %v148 = vrot.slane %v147, 2
    %v149 = vadd.f32 %v147, %v148
    %v150 = vrot.slane %v149, 1
    %v151 = vadd.f32 %v149, %v150
    %v152 = vrcp.pop 8.0
    %v153 = vmul.f32 %v144, %v152
    %v154 = vmul.f32 %v151, %v152
    %v155 = vsub.f32 %v125, %v153
    %v156 = vsub.f32 %v130, %v154
    %v157 = vmul.f32 %v155, %v155
    %v158 = vmul.f32 %v156, %v156
    %v159 = vsel %vm137, %v157, 0.0
    %v160 = vrot.slane %v159, 4
    %v161 = vadd.f32 %v159, %v160
    %v162 = vrot.slane %v161, 2
    %v163 = vadd.f32 %v161, %v162
    %v164 = vrot.slane %v163, 1
    %v165 = vadd.f32 %v163, %v164
    %v166 = vsel %vm137, %v158, 0.0
    %v167 = vrot.slane %v166, 4
    %v168 = vadd.f32 %v166, %v167
    %v169 = vrot.slane %v168, 2
    %v170 = vadd.f32 %v168, %v169
    %v171 = vrot.slane %v170, 1
    %v172 = vadd.f32 %v170, %v171
    %v173 = vmul.f32 %v165, %v152
    %v174 = vmul.f32 %v172, %v152
    %v175 = vadd.f32 %v173, 1e-05
    %v176 = vadd.f32 %v174, 1e-05
    %v177 = vrsqrt.pop %v175
    %v178 = vrsqrt.pop %v176
    %v179 = vmul.f32 %v133, %v177
    %v180 = vmul.f32 %v133, %v178
    %v181 = vmul.f32 %v153, %v179
    %v182 = vmul.f32 %v154, %v180
    %v183 = vsub.f32 %v134, %v181
    %v184 = vsub.f32 %v134, %v182
    %v185 = vlaneseq
    %v186 = vshrl.u32 %v185, 7
    %v187 = vsub.s32 0, %v186
    %v188 = vrot.slane %v179, %v187
    %v189 = vlaneseq
    %v190 = vshrl.u32 %v189, 7
    %v191 = vsub.s32 0, %v190
    %v192 = vrot.slane %v180, %v191
    %v193 = vmul.f32 %v125, %v188
    %v194 = vmul.f32 %v130, %v192
    %v195 = vlaneseq
    %v196 = vshrl.u32 %v195, 7
    %v197 = vsub.s32 0, %v196
    %v198 = vrot.slane %v183, %v197
    %v199 = vlaneseq
    %v200 = vshrl.u32 %v199, 7
    %v201 = vsub.s32 0, %v200
    %v202 = vrot.slane %v184, %v201
    %v203 = vadd.f32 %v193, %v198
    %v204 = vadd.f32 %v194, %v202
    %v205 = vmax.f32 %v203, 0.0
    %v206 = vmax.f32 %v204, 0.0
    %v207 = vlaneseq
    %v208 = vshrl.u32 %v207, 7
    %v209 = vsub.s32 0, %v208
    %v210 = vrot.slane %v135, %v209
    %v211 = vmul.f32 %v205, %v210
    %v212 = vmul.f32 %v206, %v210
    %v213 = vsel %vm137, %v211, 0.0
    %214 = vadd.xlane.f32.xlu0 %v213
    %v215 = vpop.xlane.xlu0 %214
    %v216 = vsel %vm137, %v212, 0.0
    %217 = vadd.xlane.f32.xlu0 %v216
    %v218 = vpop.xlane.xlu0 %217
    %v219 = vstv %s136
    %v220 = vadd.f32 %v215, %v219
    %v221 = vadd.f32 %v218, %v219
    %v222 = vmax.f32 %v220, 0.0
    %v223 = vmax.f32 %v221, 0.0
    %v224 = vmin.f32 %v222, 6.0
    %v225 = vmin.f32 %v223, 6.0
    %v226 = vsub.f32 %v224, %v225
    %v227 = vxor.u32 %v226, 2147483648
    %v228 = vmul.f32 %v227, 1.442695
    %v229 = vpow.pop %v228
    %v230 = vadd.f32 %v229, 1.0
    %v231 = vrcp.pop %v230
    %v232 = vmul.f32 1.0, %v231
    %v234 = vlaneseq
    %v235 = vand.u32 %v234, 127
    %v236 = vlaneseq
    %v237 = vshrl.u32 %v236, 7
    %v238 = vsub.s32 %v235, %v237
    %v239 = vrot.slane %v232, %v238
    %vm241 = vcmask 57344
    %242 = vst.msk [vmem:[#allocation8] sm:$0x1] %vm241, %v239
    // Predicated region
    $region26: #{tpu_custom_call.1} parent=1 // pred_check
      _
    $region27: #{tpu_custom_call.1} parent=1 // pred_check_branch
      %244 = sbr.rel (0) target = $region29
    $region28: #{tpu_custom_call.1} parent=1 // pred_region
      %s246 = ssub.s32 16, 16
      %247 = vsyncadd [#allocation5], %s246
      %s249 = sshll.u32 [#allocation8], 4
      %s250 = int_to_ptr.vmem [resolvable:$true] %s249
      %252 = dma.vmem_to_hbm [thread:$0]  %s250, 16, %s4, [#allocation5]
    $region29: #{tpu_custom_call.1} parent=1 // pred_fallthru
      _
    // Predicated region
    $region30: #{tpu_custom_call.1} parent=1 // pred_check
      _
    $region31: #{tpu_custom_call.1} parent=1 // pred_check_branch
      %254 = sbr.rel (0) target = $region33
    $region32: #{tpu_custom_call.1} parent=1 // pred_region
      %255 = dma.done [#allocation5], 16
    $region33: #{tpu_custom_call.1} parent=1 // pred_fallthru
      _
    %256 = vsyncpa [#allocation4], 1
    %257 = vsyncpa [#allocation7], 1
    %258 = vsyncpa [#allocation5], 1

</llo_original>
